<compile_context>
chip_gen: v7x
topology: tpu7x:2x2x1
jax: 0.10.0
libtpu: 0.0.40
codegen_flags: <defaults>
</compile_context>

<pallas_src>
import functools

import jax
import jax.numpy as jnp
from jax import lax
from jax.experimental import pallas as pl
from jax.experimental.pallas import tpu as pltpu


def _round_up(v, m):
    return ((v + m - 1) // m) * m


def _minibatch_stddev_kernel(x_ref, o_ref, acc_ref, *, chw, tile_f):
    """One grid step over a (B, tile_f) tile of the flattened combined output.

    x_ref  : (B, tile_f)  input tile (block index clamped to the x region)
    o_ref  : (B, tile_f)  combined output tile (x passthrough ++ stat channel)
    acc_ref: (1,) f32 SMEM running sum of per-feature std over the x region
    """
    i = pl.program_id(0)
    b = x_ref.shape[0]

    @pl.when(i == 0)
    def _():
        acc_ref[0] = jnp.float32(0.0)

    # Global output-feature column index of each lane in this tile.
    col = lax.broadcasted_iota(jnp.int32, (1, tile_f), 1) + i * tile_f
    is_x_col = col < chw                                  # (1, tile_f)

    # ---- reduction: unbiased std over batch, f32 accumulation --------------
    # Only for tiles overlapping the x region (pure stat tiles skip it).
    @pl.when(i * tile_f < chw)
    def _():
        # Mask out-of-range / padded columns *before* any arithmetic so garbage
        # reads in padded boundary blocks can never propagate. A fully masked
        # column gives std == 0, so it contributes nothing to the sum.
        xf = jnp.where(is_x_col, x_ref[...].astype(jnp.float32), 0.0)
        mu = jnp.mean(xf, axis=0, keepdims=True)
        var = jnp.sum((xf - mu) ** 2, axis=0, keepdims=True) / jnp.float32(b - 1)
        acc_ref[0] += jnp.sum(jnp.sqrt(var))

    # ---- output -------------------------------------------------------------
    @pl.when((i + 1) * tile_f <= chw)
    def _():
        # Tile lies fully inside the x region: plain lane-dense passthrough.
        o_ref[...] = x_ref[...]

    @pl.when((i + 1) * tile_f > chw)
    def _():
        # Boundary / stat tile. Stat columns only appear at/after the last
        # x tile, at which point acc_ref already holds the full sum
        # (sequential grid), so the stat value below is final.
        stat = (acc_ref[0] / jnp.float32(chw)).astype(o_ref.dtype)
        o_ref[...] = jnp.where(is_x_col, x_ref[...], stat)


def minibatch_std_dev(x):
    """x: (B, C, H, W) -> (B, C+1, H, W), matching the PyTorch module."""
    B, C, H, W = x.shape
    chw = C * H * W
    hw = H * W
    out_f = chw + hw
    itemsize = jnp.dtype(x.dtype).itemsize

    # Lane-aligned feature tile: keep each (B, tile_f) f32 temporary <=~256 KiB
    # while making tiles as wide as possible (memory-bound kernel: fewer,
    # bigger, lane-dense tiles -> closer to the HBM roofline).
    max_tile_elems = 64 * 1024
    tile_f = ((max_tile_elems // max(B, 1)) // 128) * 128
    tile_f = max(128, min(16384, tile_f))
    tile_f = min(tile_f, _round_up(out_f, 128))

    n_x_blocks = pl.cdiv(chw, tile_f)                # blocks covering the x region
    grid = (pl.cdiv(out_f, tile_f),)

    x2 = x.reshape(B, chw)

    kernel = functools.partial(_minibatch_stddev_kernel, chw=chw, tile_f=tile_f)

    cost = pl.CostEstimate(
        flops=6 * B * chw,
        transcendentals=chw,
        bytes_accessed=B * chw * itemsize + B * out_f * itemsize,
    )

    out2 = pl.pallas_call(
        kernel,
        grid=grid,
        in_specs=[
            pl.BlockSpec(
                (B, tile_f),
                # Clamp so pure-stat tiles never request an out-of-range block.
                lambda i: (0, jnp.minimum(i, n_x_blocks - 1)),
            )
        ],
        out_specs=pl.BlockSpec((B, tile_f), lambda i: (0, i)),
        out_shape=jax.ShapeDtypeStruct((B, out_f), x.dtype),
        scratch_shapes=[pltpu.SMEM((1,), jnp.float32)],
        compiler_params=pltpu.CompilerParams(
            dimension_semantics=("arbitrary",),   # reduction must stay sequential
        ),
        cost_estimate=cost,
    )(x2)

    return out2.reshape(B, C + 1, H, W)


def minibatch_std_dev_ref(x):
    # pure-JAX reference of the PyTorch forward (f32 statistics)
    std = jnp.std(x.astype(jnp.float32), axis=0, ddof=1)     # (C, H, W)
    stat = jnp.mean(std).astype(x.dtype)                     # scalar
    B, _, H, W = x.shape
    stat_map = jnp.broadcast_to(stat, (B, 1, H, W))
    return jnp.concatenate([x, stat_map], axis=1)


if __name__ == "__main__":
    key = jax.random.PRNGKey(0)
    B, C, H, W = 2, 4, 16, 16
    x = jax.random.normal(key, (B, C, H, W), dtype=jnp.float32)

    out = jax.block_until_ready(minibatch_std_dev(x))
    ref = minibatch_std_dev_ref(x)
    assert out.shape == (B, C + 1, H, W), out.shape
    assert jnp.allclose(out, ref, atol=1e-5, rtol=1e-5), (
        float(jnp.max(jnp.abs(out - ref)))
    )

    # Ragged case (C*H*W and H*W not multiples of 128) exercising the masked
    # boundary-tile path.
    x2 = jax.random.normal(jax.random.PRNGKey(1), (3, 3, 7, 7), dtype=jnp.float32)
    out2 = jax.block_until_ready(minibatch_std_dev(x2))
    ref2 = minibatch_std_dev_ref(x2)
    assert out2.shape == (3, 4, 7, 7), out2.shape
    assert jnp.allclose(out2, ref2, atol=1e-5, rtol=1e-5), (
        float(jnp.max(jnp.abs(out2 - ref2)))
    )

    # Larger multi-tile case so several grid steps (passthrough tiles, the
    # boundary tile, and the accumulator carry) are exercised.
    x3 = jax.random.normal(jax.random.PRNGKey(2), (4, 32, 32, 32), dtype=jnp.float32)
    out3 = jax.block_until_ready(minibatch_std_dev(x3))
    ref3 = minibatch_std_dev_ref(x3)
    assert out3.shape == (4, 33, 32, 32), out3.shape
    assert jnp.allclose(out3, ref3, atol=1e-5, rtol=1e-5), (
        float(jnp.max(jnp.abs(out3 - ref3)))
    )

    print("KERNEL_OK")
</pallas_src>

<mosaic_0001>
module attributes {stable_mosaic.version = 11 : i64} {
  func.func @_minibatch_stddev_kernel(%arg0: i32, %arg1: memref<2x1280xf32, #tpu.memory_space<vmem>>, %arg2: memref<2x1280xf32, #tpu.memory_space<vmem>>, %arg3: memref<1xf32, #tpu.memory_space<smem>>) attributes {dimension_semantics = [#tpu.dimension_semantics<arbitrary>], iteration_bounds = array<i64: 1>, scalar_prefetch = 0 : i64, scratch_operands = 1 : i64, tpu.core_type = #tpu.core_type<tc>, window_params = [{transform_indices = @transform_0, window_bounds = array<i64: 2, 1280>}, {transform_indices = @transform_1, window_bounds = array<i64: 2, 1280>}]} {
    %c0_i32 = arith.constant 0 : i32
    %0 = arith.cmpi eq, %arg0, %c0_i32 : i32
    %1 = arith.extui %0 : i1 to i32
    %c0_i32_0 = arith.constant 0 : i32
    %2 = arith.cmpi ne, %1, %c0_i32_0 : i32
    scf.if %2 {
      %cst = arith.constant 0.000000e+00 : f32
      %c0 = arith.constant 0 : index
      %23 = memref.load %arg3[%c0] : memref<1xf32, #tpu.memory_space<smem>>
      memref.store %cst, %arg3[%c0] : memref<1xf32, #tpu.memory_space<smem>>
    } else {
    }
    %3 = tpu.iota {dimensions = array<i32: 1>} : vector<1x1280xi32>
    %c1280_i32 = arith.constant 1280 : i32
    %4 = arith.muli %arg0, %c1280_i32 : i32
    %5 = vector.broadcast %4 : i32 to vector<1x1280xi32>
    %6 = arith.addi %3, %5 : vector<1x1280xi32>
    %c1024_i32 = arith.constant 1024 : i32
    %7 = vector.broadcast %c1024_i32 : i32 to vector<1x1280xi32>
    %8 = arith.cmpi slt, %6, %7 : vector<1x1280xi32>
    %c1280_i32_1 = arith.constant 1280 : i32
    %9 = arith.muli %arg0, %c1280_i32_1 : i32
    %c1024_i32_2 = arith.constant 1024 : i32
    %10 = arith.cmpi slt, %9, %c1024_i32_2 : i32
    %11 = arith.extui %10 : i1 to i32
    %c0_i32_3 = arith.constant 0 : i32
    %12 = arith.cmpi ne, %11, %c0_i32_3 : i32
    scf.if %12 {
      %c0 = arith.constant 0 : index
      %c0_11 = arith.constant 0 : index
      %23 = vector.load %arg1[%c0, %c0_11] : memref<2x1280xf32, #tpu.memory_space<vmem>>, vector<2x1280xf32>
      %cst = arith.constant 0.000000e+00 : f32
      %24 = vector.shape_cast %8 : vector<1x1280xi1> to vector<1x1280xi1>
      %25 = vector.broadcast %24 : vector<1x1280xi1> to vector<2x1280xi1>
      %26 = vector.broadcast %cst : f32 to vector<2x1280xf32>
      %27 = arith.select %25, %23, %26 : vector<2x1280xi1>, vector<2x1280xf32>
      %cst_12 = arith.constant dense<0.000000e+00> : vector<1280xf32>
      %28 = vector.multi_reduction <add>, %27, %cst_12 [0] : vector<2x1280xf32> to vector<1280xf32>
      %29 = vector.shape_cast %28 : vector<1280xf32> to vector<1x1280xf32>
      %cst_13 = arith.constant 2.000000e+00 : f32
      %30 = vector.broadcast %cst_13 : f32 to vector<1x1280xf32>
      %31 = arith.divf %29, %30 : vector<1x1280xf32>
      %32 = vector.broadcast %31 : vector<1x1280xf32> to vector<2x1280xf32>
      %33 = arith.subf %27, %32 : vector<2x1280xf32>
      %34 = arith.mulf %33, %33 : vector<2x1280xf32>
      %cst_14 = arith.constant dense<0.000000e+00> : vector<1280xf32>
      %35 = vector.multi_reduction <add>, %34, %cst_14 [0] : vector<2x1280xf32> to vector<1280xf32>
      %36 = vector.shape_cast %35 : vector<1280xf32> to vector<1x1280xf32>
      %cst_15 = arith.constant 1.000000e+00 : f32
      %37 = vector.broadcast %cst_15 : f32 to vector<1x1280xf32>
      %38 = arith.divf %36, %37 : vector<1x1280xf32>
      %c0_16 = arith.constant 0 : index
      %39 = memref.load %arg3[%c0_16] : memref<1xf32, #tpu.memory_space<smem>>
      %40 = math.sqrt %38 : vector<1x1280xf32>
      %41 = vector.shape_cast %40 : vector<1x1280xf32> to vector<1x1x1280xf32>
      %cst_17 = arith.constant dense<0.000000e+00> : vector<1xf32>
      %42 = vector.multi_reduction <add>, %41, %cst_17 [1, 2] : vector<1x1x1280xf32> to vector<1xf32>
      %43 = vector.shape_cast %42 : vector<1xf32> to vector<1x1x1xf32>
      %44 = vector.extract %43[0, 0, 0] : f32 from vector<1x1x1xf32>
      %45 = arith.addf %39, %44 : f32
      %c0_18 = arith.constant 0 : index
      %46 = memref.load %arg3[%c0_18] : memref<1xf32, #tpu.memory_space<smem>>
      memref.store %45, %arg3[%c0_18] : memref<1xf32, #tpu.memory_space<smem>>
    } else {
    }
    %c1_i32 = arith.constant 1 : i32
    %13 = arith.addi %arg0, %c1_i32 : i32
    %c1280_i32_4 = arith.constant 1280 : i32
    %14 = arith.muli %13, %c1280_i32_4 : i32
    %c1024_i32_5 = arith.constant 1024 : i32
    %15 = arith.cmpi sle, %14, %c1024_i32_5 : i32
    %16 = arith.extui %15 : i1 to i32
    %c0_i32_6 = arith.constant 0 : i32
    %17 = arith.cmpi ne, %16, %c0_i32_6 : i32
    scf.if %17 {
      %c0 = arith.constant 0 : index
      %c0_11 = arith.constant 0 : index
      %23 = vector.load %arg1[%c0, %c0_11] : memref<2x1280xf32, #tpu.memory_space<vmem>>, vector<2x1280xf32>
      %c0_12 = arith.constant 0 : index
      %c0_13 = arith.constant 0 : index
      %24 = vector.load %arg2[%c0_12, %c0_13] : memref<2x1280xf32, #tpu.memory_space<vmem>>, vector<2x1280xf32>
      tpu.vector_store %arg2[%c0_12, %c0_13], %23 {strides = array<i32>} : memref<2x1280xf32, #tpu.memory_space<vmem>>, vector<2x1280xf32>,
    } else {
    }
    %c1_i32_7 = arith.constant 1 : i32
    %18 = arith.addi %arg0, %c1_i32_7 : i32
    %c1280_i32_8 = arith.constant 1280 : i32
    %19 = arith.muli %18, %c1280_i32_8 : i32
    %c1024_i32_9 = arith.constant 1024 : i32
    %20 = arith.cmpi sgt, %19, %c1024_i32_9 : i32
    %21 = arith.extui %20 : i1 to i32
    %c0_i32_10 = arith.constant 0 : i32
    %22 = arith.cmpi ne, %21, %c0_i32_10 : i32
    scf.if %22 {
      %c0 = arith.constant 0 : index
      %23 = memref.load %arg3[%c0] : memref<1xf32, #tpu.memory_space<smem>>
      %cst = arith.constant 1.024000e+03 : f32
      %24 = arith.divf %23, %cst : f32
      %c0_11 = arith.constant 0 : index
      %c0_12 = arith.constant 0 : index
      %25 = vector.load %arg1[%c0_11, %c0_12] : memref<2x1280xf32, #tpu.memory_space<vmem>>, vector<2x1280xf32>
      %26 = vector.shape_cast %8 : vector<1x1280xi1> to vector<1x1280xi1>
      %27 = vector.broadcast %26 : vector<1x1280xi1> to vector<2x1280xi1>
      %28 = vector.broadcast %24 : f32 to vector<2x1280xf32>
      %29 = arith.select %27, %25, %28 : vector<2x1280xi1>, vector<2x1280xf32>
      %c0_13 = arith.constant 0 : index
      %c0_14 = arith.constant 0 : index
      %30 = vector.load %arg2[%c0_13, %c0_14] : memref<2x1280xf32, #tpu.memory_space<vmem>>, vector<2x1280xf32>
      tpu.vector_store %arg2[%c0_13, %c0_14], %29 {strides = array<i32>} : memref<2x1280xf32, #tpu.memory_space<vmem>>, vector<2x1280xf32>,
    } else {
    }
    return
  }
  func.func @transform_0(%arg0: i32) -> (i32, i32) {
    %c0_i32 = arith.constant 0 : i32
    %0 = arith.minsi %arg0, %c0_i32 : i32
    %c0_i32_0 = arith.constant 0 : i32
    %c0_i32_1 = arith.constant 0 : i32
    return %c0_i32_0, %0 : i32, i32
  }
  func.func @transform_1(%arg0: i32) -> (i32, i32) {
    %c0_i32 = arith.constant 0 : i32
    %c0_i32_0 = arith.constant 0 : i32
    return %c0_i32, %arg0 : i32, i32
  }
}

</mosaic_0001>

<llo_original>
// kernel: tpu_custom_call.1
$region0: #{tpu_custom_call.1}
  #allocation0 [shape = 'u32[]', space=smem, size = 0x4, offset = 0x4, fixed_abs, tag = 'smem constant byte address 0x4 - core index']
  #allocation1 [shape = 'u32[144,128]{1,0:T(1,128)}', space=vmem, size = 0x12000, scoped, tag = 'internal scratch']
  #allocation2 [shape = 'f32[1]{0:T(128)}', space=smem, size = 0x200, scoped, tag = 'scratch operand']
  %s0 = inlined_call_operand.hbm [shape: f32[2,1024], index: 0, kind: input, shape index: {}]
  %s1 = inlined_call_operand.hbm [shape: f32[2,1280], index: 1, kind: output, shape index: {}]
  %s2 = sld [smem:[#allocation0]]
  $region34: #{tpu_custom_call.1} parent=0
    _
  %s4 = ssub.s32 1, %s2
  %s5 = scalar_select 0, %s4, %s2
  $region1: #{tpu_custom_call.1} parent=0
    #allocation3 [shape = 'u8[10240]{0}', space=vmem, size = 0x2800, scoped, tag = 'input window, operand 0, single buffered']
    #allocation4 [shape = 's32[1]{0}', space=sflag, size = 0x4, scoped, tag = 'scoped memory for tpu_custom_call.1']
    #allocation5 [shape = 's32[1]{0}', space=sflag, size = 0x4, scoped, tag = 'scoped memory for tpu_custom_call.1']
    #allocation6 [shape = 'u8[10240]{0}', space=vmem, size = 0x2800, scoped, tag = 'output window, operand 0, single buffered']
    %6 = vsyncpa [#allocation4], 0
    %7 = vsyncpa [#allocation5], 0
    // Predicated region
    $region2: #{tpu_custom_call.1} parent=1 // pred_check
      _
    $region3: #{tpu_custom_call.1} parent=1 // pred_check_branch
      %9 = sbr.rel (0) target = $region5
    $region4: #{tpu_custom_call.1} parent=1 // pred_region
      %s11 = ssub.s32 320, 256
      %12 = vsyncadd [#allocation4], %s11
      %s14 = sshll.u32 [#allocation3], 4
      %s15 = int_to_ptr.vmem [resolvable:$true] %s14
      %17 = dma.hbm_to_vmem [thread:$0]  %s0, 256, %s15, [#allocation4]
    $region5: #{tpu_custom_call.1} parent=1 // pred_fallthru
      _
    // Predicated region
    $region6: #{tpu_custom_call.1} parent=1 // pred_check
      _
    $region7: #{tpu_custom_call.1} parent=1 // pred_check_branch
      %19 = sbr.rel (0) target = $region9
    $region8: #{tpu_custom_call.1} parent=1 // pred_region
      %20 = dma.done [#allocation4], 320
    $region9: #{tpu_custom_call.1} parent=1 // pred_fallthru
      _
    %p21 = scmp.eq.s32.totalorder 0, 0
    // Predicated region
    $region10: #{tpu_custom_call.1} parent=1 // pred_check
      %p22 = pneg %p21
    $region11: #{tpu_custom_call.1} parent=1 // pred_check_branch
      %24 = sbr.rel (%p22) target = $region13
    $region12: #{tpu_custom_call.1} parent=1 // pred_region
      %s25 = scalar_lea.smem [#allocation2], 0
      %26 = sst [smem:[%s25]] 0.0
    $region13: #{tpu_custom_call.1} parent=1 // pred_fallthru
      _
    %v27 = vlaneseq
    %v28 = vand.u32 %v27, 127
    %v29 = vadd.s32 %v28, 128
    %v30 = vadd.s32 %v28, 256
    %v31 = vadd.s32 %v28, 384
    %v32 = vadd.s32 %v28, 512
    %v33 = vadd.s32 %v28, 640
    %v34 = vadd.s32 %v28, 768
    %v35 = vadd.s32 %v28, 896
    %v36 = vadd.s32 %v28, 1024
    %v37 = vadd.s32 %v28, 1152
    %s38 = smul.u32 0, 1280
    %v39 = vstv %s38
    %v40 = vadd.s32 %v28, %v39
    %v41 = vadd.s32 %v29, %v39
    %v42 = vadd.s32 %v30, %v39
    %v43 = vadd.s32 %v31, %v39
    %v44 = vadd.s32 %v32, %v39
    %v45 = vadd.s32 %v33, %v39
    %v46 = vadd.s32 %v34, %v39
    %v47 = vadd.s32 %v35, %v39
    %v48 = vadd.s32 %v36, %v39
    %v49 = vadd.s32 %v37, %v39
    %vm50 = vcmp.lt.s32.totalorder %v40, 1024
    %vm51 = vcmp.lt.s32.totalorder %v41, 1024
    %vm52 = vcmp.lt.s32.totalorder %v42, 1024
    %vm53 = vcmp.lt.s32.totalorder %v43, 1024
    %vm54 = vcmp.lt.s32.totalorder %v44, 1024
    %vm55 = vcmp.lt.s32.totalorder %v45, 1024
    %vm56 = vcmp.lt.s32.totalorder %v46, 1024
    %vm57 = vcmp.lt.s32.totalorder %v47, 1024
    %vm58 = vcmp.lt.s32.totalorder %v48, 1024
    %vm59 = vcmp.lt.s32.totalorder %v49, 1024
    %p60 = scmp.lt.s32.totalorder %s38, 1024
    // Predicated region
    $region14: #{tpu_custom_call.1} parent=1 // pred_check
      %p61 = pneg %p60
    $region15: #{tpu_custom_call.1} parent=1 // pred_check_branch
      %63 = sbr.rel (%p61) target = $region17
    $region16: #{tpu_custom_call.1} parent=1 // pred_region
      %v64 = vld [vmem:[#allocation3] sm:$0xff]
      %v65 = vld [vmem:[#allocation3 + $0x8] sm:$0xff]
      %v66 = vld [vmem:[#allocation3 + $0x10] sm:$0xf]
      %v67 = vsel %vm50, 1, 0
      %v68 = vsel %vm51, 1, 0
      %v69 = vsel %vm52, 1, 0
      %v70 = vsel %vm53, 1, 0
      %v71 = vsel %vm54, 1, 0
      %v72 = vsel %vm55, 1, 0
      %v73 = vsel %vm56, 1, 0
      %v74 = vsel %vm57, 1, 0
      %v75 = vsel %vm58, 1, 0
      %v76 = vsel %vm59, 1, 0
      %vm77 = vcmp.eq.s32.totalorder %v67, 1
      %vm78 = vcmp.eq.s32.totalorder %v68, 1
      %vm79 = vcmp.eq.s32.totalorder %v69, 1
      %vm80 = vcmp.eq.s32.totalorder %v70, 1
      %vm81 = vcmp.eq.s32.totalorder %v71, 1
      %vm82 = vcmp.eq.s32.totalorder %v72, 1
      %vm83 = vcmp.eq.s32.totalorder %v73, 1
      %vm84 = vcmp.eq.s32.totalorder %v74, 1
      %vm85 = vcmp.eq.s32.totalorder %v75, 1
      %vm86 = vcmp.eq.s32.totalorder %v76, 1
      %v90 = vcombine.high %v64, %v64
      %v92 = vunpack.c.l.s4 1983009808
      %v93 = vunpack.c.0.s8 %v92
      %v94 = vlaneseq
      %v95 = vshrl.u32 %v94, 7
      %v96 = vsub.s32 %v93, %v95
      %v97 = vrot.slane %v64, %v96
      %v99 = vunpack.c.l.s4 1983009808
      %v100 = vunpack.c.0.s8 %v99
      %v101 = vlaneseq
      %v102 = vshrl.u32 %v101, 7
      %v103 = vsub.s32 %v100, %v102
      %v104 = vrot.slane %v90, %v103
      %v105 = vcombine.high %v97, %v97
      %v106 = vcombine.high %v104, %v104
      %v107 = vcombine.high %v65, %v65
      %v109 = vunpack.c.l.s4 1983009808
      %v110 = vunpack.c.0.s8 %v109
      %v111 = vlaneseq
      %v112 = vshrl.u32 %v111, 7
      %v113 = vsub.s32 %v110, %v112
      %v114 = vrot.slane %v65, %v113
      %v116 = vunpack.c.l.s4 1983009808
      %v117 = vunpack.c.0.s8 %v116
      %v118 = vlaneseq
      %v119 = vshrl.u32 %v118, 7
      %v120 = vsub.s32 %v117, %v119
      %v121 = vrot.slane %v107, %v120
      %v122 = vcombine.high %v114, %v114
      %v123 = vcombine.high %v121, %v121
      %v125 = vunpack.c.l.s4 1983009808
      %v126 = vunpack.c.0.s8 %v125
      %v127 = vlaneseq
      %v128 = vshrl.u32 %v127, 7
      %v129 = vsub.s32 %v126, %v128
      %v130 = vrot.slane %v66, %v129
      %v131 = vcombine.high %v130, %v130
      %v142 = vsel %vm77, %v97, 0.0
      %v143 = vsel %vm78, %v105, 0.0
      %v144 = vsel %vm79, %v104, 0.0
      %v145 = vsel %vm80, %v106, 0.0
      %v146 = vsel %vm81, %v114, 0.0
      %v147 = vsel %vm82, %v122, 0.0
      %v148 = vsel %vm83, %v121, 0.0
      %v149 = vsel %vm84, %v123, 0.0
      %v150 = vsel %vm85, %v130, 0.0
      %v151 = vsel %vm86, %v131, 0.0
      %vm152 = vcmask 1041408
      %v153 = vsel %vm152, %v142, 0.0
      %v154 = vrot.slane %v153, 4
      %v155 = vadd.f32 %v153, %v154
      %v156 = vrot.slane %v155, 2
      %v157 = vadd.f32 %v155, %v156
      %v158 = vrot.slane %v157, 1
      %v159 = vadd.f32 %v157, %v158
      %v160 = vsel %vm152, %v143, 0.0
      %v161 = vrot.slane %v160, 4
      %v162 = vadd.f32 %v160, %v161
      %v163 = vrot.slane %v162, 2
      %v164 = vadd.f32 %v162, %v163
      %v165 = vrot.slane %v164, 1
      %v166 = vadd.f32 %v164, %v165
      %v167 = vsel %vm152, %v144, 0.0
      %v168 = vrot.slane %v167, 4
      %v169 = vadd.f32 %v167, %v168
      %v170 = vrot.slane %v169, 2
      %v171 = vadd.f32 %v169, %v170
      %v172 = vrot.slane %v171, 1
      %v173 = vadd.f32 %v171, %v172
      %v174 = vsel %vm152, %v145, 0.0
      %v175 = vrot.slane %v174, 4
      %v176 = vadd.f32 %v174, %v175
      %v177 = vrot.slane %v176, 2
      %v178 = vadd.f32 %v176, %v177
      %v179 = vrot.slane %v178, 1
      %v180 = vadd.f32 %v178, %v179
      %v181 = vsel %vm152, %v146, 0.0
      %v182 = vrot.slane %v181, 4
      %v183 = vadd.f32 %v181, %v182
      %v184 = vrot.slane %v183, 2
      %v185 = vadd.f32 %v183, %v184
      %v186 = vrot.slane %v185, 1
      %v187 = vadd.f32 %v185, %v186
      %v188 = vsel %vm152, %v147, 0.0
      %v189 = vrot.slane %v188, 4
      %v190 = vadd.f32 %v188, %v189
      %v191 = vrot.slane %v190, 2
      %v192 = vadd.f32 %v190, %v191
      %v193 = vrot.slane %v192, 1
      %v194 = vadd.f32 %v192, %v193
      %v195 = vsel %vm152, %v148, 0.0
      %v196 = vrot.slane %v195, 4
      %v197 = vadd.f32 %v195, %v196
      %v198 = vrot.slane %v197, 2
      %v199 = vadd.f32 %v197, %v198
      %v200 = vrot.slane %v199, 1
      %v201 = vadd.f32 %v199, %v200
      %v202 = vsel %vm152, %v149, 0.0
      %v203 = vrot.slane %v202, 4
      %v204 = vadd.f32 %v202, %v203
      %v205 = vrot.slane %v204, 2
      %v206 = vadd.f32 %v204, %v205
      %v207 = vrot.slane %v206, 1
      %v208 = vadd.f32 %v206, %v207
      %v209 = vsel %vm152, %v150, 0.0
      %v210 = vrot.slane %v209, 4
      %v211 = vadd.f32 %v209, %v210
      %v212 = vrot.slane %v211, 2
      %v213 = vadd.f32 %v211, %v212
      %v214 = vrot.slane %v213, 1
      %v215 = vadd.f32 %v213, %v214
      %v216 = vsel %vm152, %v151, 0.0
      %v217 = vrot.slane %v216, 4
      %v218 = vadd.f32 %v216, %v217
      %v219 = vrot.slane %v218, 2
      %v220 = vadd.f32 %v218, %v219
      %v221 = vrot.slane %v220, 1
      %v222 = vadd.f32 %v220, %v221
      %v223 = vrcp.pop 2.0
      %v224 = vmul.f32 %v159, %v223
      %v225 = vmul.f32 %v166, %v223
      %v226 = vmul.f32 %v173, %v223
      %v227 = vmul.f32 %v180, %v223
      %v228 = vmul.f32 %v187, %v223
      %v229 = vmul.f32 %v194, %v223
      %v230 = vmul.f32 %v201, %v223
      %v231 = vmul.f32 %v208, %v223
      %v232 = vmul.f32 %v215, %v223
      %v233 = vmul.f32 %v222, %v223
      %v234 = vsub.f32 %v142, %v224
      %v235 = vsub.f32 %v143, %v225
      %v236 = vsub.f32 %v144, %v226
      %v237 = vsub.f32 %v145, %v227
      %v238 = vsub.f32 %v146, %v228
      %v239 = vsub.f32 %v147, %v229
      %v240 = vsub.f32 %v148, %v230
      %v241 = vsub.f32 %v149, %v231
      %v242 = vsub.f32 %v150, %v232
      %v243 = vsub.f32 %v151, %v233
      %v244 = vmul.f32 %v234, %v234
      %v245 = vmul.f32 %v235, %v235
      %v246 = vmul.f32 %v236, %v236
      %v247 = vmul.f32 %v237, %v237
      %v248 = vmul.f32 %v238, %v238
      %v249 = vmul.f32 %v239, %v239
      %v250 = vmul.f32 %v240, %v240
      %v251 = vmul.f32 %v241, %v241
      %v252 = vmul.f32 %v242, %v242
      %v253 = vmul.f32 %v243, %v243
      %v254 = vsel %vm152, %v244, 0.0
      %v255 = vrot.slane %v254, 4
      %v256 = vadd.f32 %v254, %v255
      %v257 = vrot.slane %v256, 2
      %v258 = vadd.f32 %v256, %v257
      %v259 = vrot.slane %v258, 1
      %v260 = vadd.f32 %v258, %v259
      %v261 = vsel %vm152, %v245, 0.0
      %v262 = vrot.slane %v261, 4
      %v263 = vadd.f32 %v261, %v262
      %v264 = vrot.slane %v263, 2
      %v265 = vadd.f32 %v263, %v264
      %v266 = vrot.slane %v265, 1
      %v267 = vadd.f32 %v265, %v266
      %v268 = vsel %vm152, %v246, 0.0
      %v269 = vrot.slane %v268, 4
      %v270 = vadd.f32 %v268, %v269
      %v271 = vrot.slane %v270, 2
      %v272 = vadd.f32 %v270, %v271
      %v273 = vrot.slane %v272, 1
      %v274 = vadd.f32 %v272, %v273
      %v275 = vsel %vm152, %v247, 0.0
      %v276 = vrot.slane %v275, 4
      %v277 = vadd.f32 %v275, %v276
      %v278 = vrot.slane %v277, 2
      %v279 = vadd.f32 %v277, %v278
      %v280 = vrot.slane %v279, 1
      %v281 = vadd.f32 %v279, %v280
      %v282 = vsel %vm152, %v248, 0.0
      %v283 = vrot.slane %v282, 4
      %v284 = vadd.f32 %v282, %v283
      %v285 = vrot.slane %v284, 2
      %v286 = vadd.f32 %v284, %v285
      %v287 = vrot.slane %v286, 1
      %v288 = vadd.f32 %v286, %v287
      %v289 = vsel %vm152, %v249, 0.0
      %v290 = vrot.slane %v289, 4
      %v291 = vadd.f32 %v289, %v290
      %v292 = vrot.slane %v291, 2
      %v293 = vadd.f32 %v291, %v292
      %v294 = vrot.slane %v293, 1
      %v295 = vadd.f32 %v293, %v294
      %v296 = vsel %vm152, %v250, 0.0
      %v297 = vrot.slane %v296, 4
      %v298 = vadd.f32 %v296, %v297
      %v299 = vrot.slane %v298, 2
      %v300 = vadd.f32 %v298, %v299
      %v301 = vrot.slane %v300, 1
      %v302 = vadd.f32 %v300, %v301
      %v303 = vsel %vm152, %v251, 0.0
      %v304 = vrot.slane %v303, 4
      %v305 = vadd.f32 %v303, %v304
      %v306 = vrot.slane %v305, 2
      %v307 = vadd.f32 %v305, %v306
      %v308 = vrot.slane %v307, 1
      %v309 = vadd.f32 %v307, %v308
      %v310 = vsel %vm152, %v252, 0.0
      %v311 = vrot.slane %v310, 4
      %v312 = vadd.f32 %v310, %v311
      %v313 = vrot.slane %v312, 2
      %v314 = vadd.f32 %v312, %v313
      %v315 = vrot.slane %v314, 1
      %v316 = vadd.f32 %v314, %v315
      %v317 = vsel %vm152, %v253, 0.0
      %v318 = vrot.slane %v317, 4
      %v319 = vadd.f32 %v317, %v318
      %v320 = vrot.slane %v319, 2
      %v321 = vadd.f32 %v319, %v320
      %v322 = vrot.slane %v321, 1
      %v323 = vadd.f32 %v321, %v322
      %s324 = sld [smem:[#allocation2]]
      %v325 = vrsqrt.pop %v260
      %v326 = vmul.f32 %v260, %v325
      %vm327 = vcmp.eq.f32.partialorder %v260, inf
      %v328 = vsel %vm327, %v260, %v326
      %vm329 = vcmp.eq.f32.partialorder %v260, 0.0
      %v330 = vand.u32 %v260, 2147483648
      %v331 = vsel %vm329, %v330, %v328
      %v332 = vrsqrt.pop %v267
      %v333 = vmul.f32 %v267, %v332
      %vm334 = vcmp.eq.f32.partialorder %v267, inf
      %v335 = vsel %vm334, %v267, %v333
      %vm336 = vcmp.eq.f32.partialorder %v267, 0.0
      %v337 = vand.u32 %v267, 2147483648
      %v338 = vsel %vm336, %v337, %v335
      %v339 = vrsqrt.pop %v274
      %v340 = vmul.f32 %v274, %v339
      %vm341 = vcmp.eq.f32.partialorder %v274, inf
      %v342 = vsel %vm341, %v274, %v340
      %vm343 = vcmp.eq.f32.partialorder %v274, 0.0
      %v344 = vand.u32 %v274, 2147483648
      %v345 = vsel %vm343, %v344, %v342
      %v346 = vrsqrt.pop %v281
      %v347 = vmul.f32 %v281, %v346
      %vm348 = vcmp.eq.f32.partialorder %v281, inf
      %v349 = vsel %vm348, %v281, %v347
      %vm350 = vcmp.eq.f32.partialorder %v281, 0.0
      %v351 = vand.u32 %v281, 2147483648
      %v352 = vsel %vm350, %v351, %v349
      %v353 = vrsqrt.pop %v288
      %v354 = vmul.f32 %v288, %v353
      %vm355 = vcmp.eq.f32.partialorder %v288, inf
      %v356 = vsel %vm355, %v288, %v354
      %vm357 = vcmp.eq.f32.partialorder %v288, 0.0
      %v358 = vand.u32 %v288, 2147483648
      %v359 = vsel %vm357, %v358, %v356
      %v360 = vrsqrt.pop %v295
      %v361 = vmul.f32 %v295, %v360
      %vm362 = vcmp.eq.f32.partialorder %v295, inf
      %v363 = vsel %vm362, %v295, %v361
      %vm364 = vcmp.eq.f32.partialorder %v295, 0.0
      %v365 = vand.u32 %v295, 2147483648
      %v366 = vsel %vm364, %v365, %v363
      %v367 = vrsqrt.pop %v302
      %v368 = vmul.f32 %v302, %v367
      %vm369 = vcmp.eq.f32.partialorder %v302, inf
      %v370 = vsel %vm369, %v302, %v368
      %vm371 = vcmp.eq.f32.partialorder %v302, 0.0
      %v372 = vand.u32 %v302, 2147483648
      %v373 = vsel %vm371, %v372, %v370
      %v374 = vrsqrt.pop %v309
      %v375 = vmul.f32 %v309, %v374
      %vm376 = vcmp.eq.f32.partialorder %v309, inf
      %v377 = vsel %vm376, %v309, %v375
      %vm378 = vcmp.eq.f32.partialorder %v309, 0.0
      %v379 = vand.u32 %v309, 2147483648
      %v380 = vsel %vm378, %v379, %v377
      %v381 = vrsqrt.pop %v316
      %v382 = vmul.f32 %v316, %v381
      %vm383 = vcmp.eq.f32.partialorder %v316, inf
      %v384 = vsel %vm383, %v316, %v382
      %vm385 = vcmp.eq.f32.partialorder %v316, 0.0
      %v386 = vand.u32 %v316, 2147483648
      %v387 = vsel %vm385, %v386, %v384
      %v388 = vrsqrt.pop %v323
      %v389 = vmul.f32 %v323, %v388
      %vm390 = vcmp.eq.f32.partialorder %v323, inf
      %v391 = vsel %vm390, %v323, %v389
      %vm392 = vcmp.eq.f32.partialorder %v323, 0.0
      %v393 = vand.u32 %v323, 2147483648
      %v394 = vsel %vm392, %v393, %v391
      %vm395 = vcmask 1040384
      %v396 = vsel %vm395, %v331, 0.0
      %v397 = vsel %vm395, %v338, 0.0
      %v398 = vadd.f32 %v396, %v397
      %v399 = vsel %vm395, %v345, 0.0
      %v400 = vadd.f32 %v398, %v399
      %v401 = vsel %vm395, %v352, 0.0
      %v402 = vadd.f32 %v400, %v401
      %v403 = vsel %vm395, %v359, 0.0
      %v404 = vadd.f32 %v402, %v403
      %v405 = vsel %vm395, %v366, 0.0
      %v406 = vadd.f32 %v404, %v405
      %v407 = vsel %vm395, %v373, 0.0
      %v408 = vadd.f32 %v406, %v407
      %v409 = vsel %vm395, %v380, 0.0
      %v410 = vadd.f32 %v408, %v409
      %v411 = vsel %vm395, %v387, 0.0
      %v412 = vadd.f32 %v410, %v411
      %v413 = vsel %vm395, %v394, 0.0
      %v414 = vadd.f32 %v412, %v413
      %415 = vadd.xlane.f32.xlu0 %v414
      %v416 = vpop.xlane.xlu0 %415
      %v417 = vrot.slane %v416, 4
      %v418 = vadd.f32 %v416, %v417
      %v419 = vrot.slane %v418, 2
      %v420 = vadd.f32 %v418, %v419
      %v421 = vrot.slane %v420, 1
      %v422 = vadd.f32 %v420, %v421
      %s423 = vtos %v422
      %s424 = sadd.f32 %s324, %s423
      %s425 = scalar_lea.smem [#allocation2], 0
      %426 = sst [smem:[%s425]] %s424
    $region17: #{tpu_custom_call.1} parent=1 // pred_fallthru
      _
    %s427 = sadd.s32 0, 1
    %s428 = smul.u32 %s427, 1280
    %p429 = scmp.le.s32.totalorder %s428, 1024
    // Predicated region
    $region18: #{tpu_custom_call.1} parent=1 // pred_check
      %p430 = pneg %p429
    $region19: #{tpu_custom_call.1} parent=1 // pred_check_branch
      %432 = sbr.rel (%p430) target = $region21
    $region20: #{tpu_custom_call.1} parent=1 // pred_region
      %v433 = vld [vmem:[#allocation3] sm:$0xff]
      %v434 = vld [vmem:[#allocation3 + $0x8] sm:$0xff]
      %v435 = vld [vmem:[#allocation3 + $0x10] sm:$0xf]
      %436 = vst [vmem:[#allocation6] sm:$0xff] %v433
      %437 = vst [vmem:[#allocation6 + $0x8] sm:$0xff] %v434
      %438 = vst [vmem:[#allocation6 + $0x10] sm:$0xf] %v435
    $region21: #{tpu_custom_call.1} parent=1 // pred_fallthru
      _
    %p439 = scmp.gt.s32.totalorder %s428, 1024
    // Predicated region
    $region22: #{tpu_custom_call.1} parent=1 // pred_check
      %p440 = pneg %p439
    $region23: #{tpu_custom_call.1} parent=1 // pred_check_branch
      %442 = sbr.rel (%p440) target = $region25
    $region24: #{tpu_custom_call.1} parent=1 // pred_region
      %s443 = sld [smem:[#allocation2]]
      %v444 = vrcp.pop 1024.0
      %s445 = vtos %v444
      %s446 = smul.f32 %s443, %s445
      %v447 = vld [vmem:[#allocation3] sm:$0xff]
      %v448 = vld [vmem:[#allocation3 + $0x8] sm:$0xff]
      %v449 = vld [vmem:[#allocation3 + $0x10] sm:$0xf]
      %v450 = vsel %vm50, 1, 0
      %v451 = vsel %vm51, 1, 0
      %v452 = vsel %vm52, 1, 0
      %v453 = vsel %vm53, 1, 0
      %v454 = vsel %vm54, 1, 0
      %v455 = vsel %vm55, 1, 0
      %v456 = vsel %vm56, 1, 0
      %v457 = vsel %vm57, 1, 0
      %v458 = vsel %vm58, 1, 0
      %v459 = vsel %vm59, 1, 0
      %vm460 = vcmp.eq.s32.totalorder %v450, 1
      %vm461 = vcmp.eq.s32.totalorder %v451, 1
      %vm462 = vcmp.eq.s32.totalorder %v452, 1
      %vm463 = vcmp.eq.s32.totalorder %v453, 1
      %vm464 = vcmp.eq.s32.totalorder %v454, 1
      %vm465 = vcmp.eq.s32.totalorder %v455, 1
      %vm466 = vcmp.eq.s32.totalorder %v456, 1
      %vm467 = vcmp.eq.s32.totalorder %v457, 1
      %vm468 = vcmp.eq.s32.totalorder %v458, 1
      %vm469 = vcmp.eq.s32.totalorder %v459, 1
      %v470 = vstv %s446
      %v474 = vcombine.high %v447, %v447
      %v476 = vunpack.c.l.s4 1983009808
      %v477 = vunpack.c.0.s8 %v476
      %v478 = vlaneseq
      %v479 = vshrl.u32 %v478, 7
      %v480 = vsub.s32 %v477, %v479
      %v481 = vrot.slane %v447, %v480
      %v483 = vunpack.c.l.s4 1983009808
      %v484 = vunpack.c.0.s8 %v483
      %v485 = vlaneseq
      %v486 = vshrl.u32 %v485, 7
      %v487 = vsub.s32 %v484, %v486
      %v488 = vrot.slane %v474, %v487
      %v489 = vcombine.high %v481, %v481
      %v490 = vcombine.high %v488, %v488
      %v491 = vcombine.high %v448, %v448
      %v493 = vunpack.c.l.s4 1983009808
      %v494 = vunpack.c.0.s8 %v493
      %v495 = vlaneseq
      %v496 = vshrl.u32 %v495, 7
      %v497 = vsub.s32 %v494, %v496
      %v498 = vrot.slane %v448, %v497
      %v500 = vunpack.c.l.s4 1983009808
      %v501 = vunpack.c.0.s8 %v500
      %v502 = vlaneseq
      %v503 = vshrl.u32 %v502, 7
      %v504 = vsub.s32 %v501, %v503
      %v505 = vrot.slane %v491, %v504
      %v506 = vcombine.high %v498, %v498
      %v507 = vcombine.high %v505, %v505
      %v509 = vunpack.c.l.s4 1983009808
      %v510 = vunpack.c.0.s8 %v509
      %v511 = vlaneseq
      %v512 = vshrl.u32 %v511, 7
      %v513 = vsub.s32 %v510, %v512
      %v514 = vrot.slane %v449, %v513
      %v515 = vcombine.high %v514, %v514
      %v526 = vsel %vm460, %v481, %v470
      %v527 = vsel %vm461, %v489, %v470
      %v528 = vsel %vm462, %v488, %v470
      %v529 = vsel %vm463, %v490, %v470
      %v530 = vsel %vm464, %v498, %v470
      %v531 = vsel %vm465, %v506, %v470
      %v532 = vsel %vm466, %v505, %v470
      %v533 = vsel %vm467, %v507, %v470
      %v534 = vsel %vm468, %v514, %v470
      %v535 = vsel %vm469, %v515, %v470
      %v546 = vcombine.low %v526, %v527
      %v547 = vcombine.low %v528, %v529
      %v549 = vunpack.c.l.s4 1983009808
      %v550 = vunpack.c.0.s8 %v549
      %v551 = vlaneseq
      %v552 = vshrl.u32 %v551, 7
      %v553 = vsub.s32 %v550, %v552
      %v554 = vrot.slane %v546, %v553
      %v556 = vunpack.c.l.s4 1983009808
      %v557 = vunpack.c.0.s8 %v556
      %v558 = vlaneseq
      %v559 = vshrl.u32 %v558, 7
      %v560 = vsub.s32 %v557, %v559
      %v561 = vrot.slane %v547, %v560
      %v562 = vcombine.low %v554, %v561
      %v563 = vcombine.low %v530, %v531
      %v564 = vcombine.low %v532, %v533
      %v566 = vunpack.c.l.s4 1983009808
      %v567 = vunpack.c.0.s8 %v566
      %v568 = vlaneseq
      %v569 = vshrl.u32 %v568, 7
      %v570 = vsub.s32 %v567, %v569
      %v571 = vrot.slane %v563, %v570
      %v573 = vunpack.c.l.s4 1983009808
      %v574 = vunpack.c.0.s8 %v573
      %v575 = vlaneseq
      %v576 = vshrl.u32 %v575, 7
      %v577 = vsub.s32 %v574, %v576
      %v578 = vrot.slane %v564, %v577
      %v579 = vcombine.low %v571, %v578
      %v580 = vcombine.low %v534, %v535
      %v582 = vunpack.c.l.s4 1983009808
      %v583 = vunpack.c.0.s8 %v582
      %v584 = vlaneseq
      %v585 = vshrl.u32 %v584, 7
      %v586 = vsub.s32 %v583, %v585
      %v587 = vrot.slane %v580, %v586
      %591 = vst [vmem:[#allocation6] sm:$0xff] %v562
      %592 = vst [vmem:[#allocation6 + $0x8] sm:$0xff] %v579
      %593 = vst [vmem:[#allocation6 + $0x10] sm:$0xf] %v587
    $region25: #{tpu_custom_call.1} parent=1 // pred_fallthru
      _
    // Predicated region
    $region26: #{tpu_custom_call.1} parent=1 // pred_check
      _
    $region27: #{tpu_custom_call.1} parent=1 // pred_check_branch
      %595 = sbr.rel (0) target = $region29
    $region28: #{tpu_custom_call.1} parent=1 // pred_region
      %s597 = ssub.s32 320, 320
      %598 = vsyncadd [#allocation5], %s597
      %s600 = sshll.u32 [#allocation6], 4
      %s601 = int_to_ptr.vmem [resolvable:$true] %s600
      %603 = dma.vmem_to_hbm [thread:$0]  %s601, 320, %s1, [#allocation5]
    $region29: #{tpu_custom_call.1} parent=1 // pred_fallthru
      _
    // Predicated region
    $region30: #{tpu_custom_call.1} parent=1 // pred_check
      _
    $region31: #{tpu_custom_call.1} parent=1 // pred_check_branch
      %605 = sbr.rel (0) target = $region33
    $region32: #{tpu_custom_call.1} parent=1 // pred_region
      %606 = dma.done [#allocation5], 320
    $region33: #{tpu_custom_call.1} parent=1 // pred_fallthru
      _
    %607 = vsyncpa [#allocation4], 1
    %608 = vsyncpa [#allocation5], 1

</llo_original>
